<compile_context>
chip_gen: v7x
topology: tpu7x:2x2x1
jax: 0.10.0
libtpu: 0.0.40
codegen_flags: <defaults>
</compile_context>

<pallas_src>
import jax
import jax.numpy as jnp
from jax.experimental import pallas as pl
from jax.experimental.pallas import tpu as pltpu


KSIZE = 7
PAD = 3


def _sigmoid(z):
    # exp() goes to the EUP (its own bundle slot); the divide is exact so the
    # gates match the f32 reference within tolerance.
    return 1.0 / (1.0 + jnp.exp(-z))


def cbam_kernel(x_ref, w1t_ref, w2t_ref, m_ref, o_ref):
    # x_ref  : (Bt, C, HW)   block of batch elements, lane-dense spatial dim
    # w1t_ref: (C, Cr)       fc1 weights, pre-transposed (1x1 conv == matmul)
    # w2t_ref: (Cr, C)       fc2 weights, pre-transposed
    # m_ref  : (2*HW, HW)    7x7 spatial conv folded into a dense matrix
    # o_ref  : (Bt, C, HW)
    bt, c, hw = x_ref.shape
    x = x_ref[...].astype(jnp.float32)                      # (Bt, C, HW)

    # ---------------- Channel attention ----------------
    # Lane-axis (XLU) reductions over HW; avoid a divide by pre-scaling.
    avg = jnp.sum(x, axis=2) * (1.0 / hw)                   # (Bt, C) mean pool
    mx = jnp.max(x, axis=2)                                 # (Bt, C) max pool

    w1t = w1t_ref[...]
    w2t = w2t_ref[...]

    def channel_mlp(v):                                     # (Bt, C) -> (Bt, C)
        h = jnp.maximum(
            jnp.dot(v, w1t, preferred_element_type=jnp.float32), 0.0)
        return jnp.dot(h, w2t, preferred_element_type=jnp.float32)

    ca = _sigmoid(channel_mlp(avg) + channel_mlp(mx))       # (Bt, C)
    out1 = x * ca[:, :, None]                               # (Bt, C, HW)

    # ---------------- Spatial attention ----------------
    avg_c = jnp.sum(out1, axis=1) * (1.0 / c)               # (Bt, HW)
    max_c = jnp.max(out1, axis=1)                           # (Bt, HW)
    # Lane concat at offset HW (multiple of 128) -> aligned, no relayout.
    planes = jnp.concatenate([avg_c, max_c], axis=1)        # (Bt, 2*HW)
    sa = _sigmoid(jnp.dot(planes, m_ref[...],
                          preferred_element_type=jnp.float32))   # (Bt, HW)

    o_ref[...] = (out1 * sa[:, None, :]).astype(o_ref.dtype)


def _build_spatial_conv_matrix(wsa_4d, H, W):
    """Fold Conv2d(2, 1, 7, padding=3, bias=False) weights into (2*HW, HW).

    M[c*HW + i, j] = w[0, c, yi - yj + PAD, xi - xj + PAD] when the offset
    lies inside the 7x7 window, else 0, so that
        conv_out[j] = sum_{c,i} plane_c[i] * M[c*HW + i, j]
    reproduces the zero-padded 7x7 cross-correlation of the reference
    (PyTorch Conv2d does cross-correlation, no kernel flip).
    """
    HW = H * W
    pos = jnp.arange(HW)
    y = pos // W
    x = pos % W
    dy = y[:, None] - y[None, :] + PAD                       # (HW_in, HW_out)
    dx = x[:, None] - x[None, :] + PAD
    valid = (dy >= 0) & (dy < KSIZE) & (dx >= 0) & (dx < KSIZE)
    dyc = jnp.clip(dy, 0, KSIZE - 1)
    dxc = jnp.clip(dx, 0, KSIZE - 1)
    taps = wsa_4d[0][:, dyc, dxc]                            # (2, HW, HW)
    m = jnp.where(valid[None], taps, 0.0)
    return m.reshape(2 * HW, HW).astype(jnp.float32)


def _pick_block_batch(B, C, HW, itemsize, budget_bytes=2 << 20):
    """Largest divisor of B whose (Bt, C, HW) block stays under ~budget bytes.

    Double-buffered input + output is ~4x budget plus the conv matrix
    (~0.5 MiB at HW=256) — below the default scoped-VMEM limits
    (16 MiB v5e, 32 MiB v6e/v7x) and v7x's smaller 64 MiB physical VMEM,
    while keeping blocks large enough to amortize the ~0.35 us/step overhead.
    """
    bt = max(1, min(B, budget_bytes // max(1, C * HW * itemsize)))
    while B % bt:
        bt -= 1
    return bt


def cbam_pallas(x, w1, w2, wsa_4d, *, block_batch=None):
    """CBAM forward.  x: (B, C, H, W); w1: (Cr, C); w2: (C, Cr);
    wsa_4d: (1, 2, 7, 7)."""
    B, C, H, W = x.shape
    HW = H * W
    Cr = w1.shape[0]

    x_flat = x.reshape(B, C, HW)             # free view of contiguous NCHW
    w1t = jnp.transpose(w1)                  # (C, Cr)
    w2t = jnp.transpose(w2)                  # (Cr, C)
    m = _build_spatial_conv_matrix(wsa_4d, H, W)             # (2*HW, HW)

    bt = block_batch if block_batch is not None else _pick_block_batch(
        B, C, HW, x.dtype.itemsize)
    grid = (B // bt,)

    out_flat = pl.pallas_call(
        cbam_kernel,
        out_shape=jax.ShapeDtypeStruct((B, C, HW), x.dtype),
        grid_spec=pltpu.PrefetchScalarGridSpec(
            num_scalar_prefetch=0,
            grid=grid,
            in_specs=[
                pl.BlockSpec((bt, C, HW), lambda b: (b, 0, 0)),
                # Constant index_maps -> fetched once, reused across steps.
                pl.BlockSpec((C, Cr), lambda b: (0, 0)),
                pl.BlockSpec((Cr, C), lambda b: (0, 0)),
                pl.BlockSpec((2 * HW, HW), lambda b: (0, 0)),
            ],
            out_specs=pl.BlockSpec((bt, C, HW), lambda b: (b, 0, 0)),
        ),
        compiler_params=pltpu.CompilerParams(
            # Batch blocks are fully independent -> shard across v7x's 2 TCs.
            dimension_semantics=("parallel",)),
    )(x_flat, w1t, w2t, m)
    return out_flat.reshape(B, C, H, W)


def cbam_reference(x, w1, w2, wsa_4d):
    """Pure-JAX reference mirroring the PyTorch module."""
    avg = jnp.mean(x, axis=(2, 3), keepdims=True)
    mx = jnp.max(x, axis=(2, 3), keepdims=True)

    def mlp(v):
        h = jnp.einsum('bcij,rc->brij', v, w1)
        h = jnp.maximum(h, 0.0)
        return jnp.einsum('brij,cr->bcij', h, w2)

    ca = jax.nn.sigmoid(mlp(avg) + mlp(mx))
    out1 = ca * x

    avg_c = jnp.mean(out1, axis=1, keepdims=True)
    max_c = jnp.max(out1, axis=1, keepdims=True)
    s = jnp.concatenate([avg_c, max_c], axis=1)
    conv = jax.lax.conv_general_dilated(
        s, wsa_4d, window_strides=(1, 1),
        padding=((PAD, PAD), (PAD, PAD)),
        dimension_numbers=('NCHW', 'OIHW', 'NCHW'))
    sa = jax.nn.sigmoid(conv)
    return sa * out1


if __name__ == "__main__":
    B, C, H, W = 4, 32, 16, 16
    ratio = 16
    Cr = C // ratio  # 2

    key = jax.random.PRNGKey(0)
    kx, k1, k2, k3 = jax.random.split(key, 4)

    x = jax.random.normal(kx, (B, C, H, W), dtype=jnp.float32)
    w1 = jax.random.normal(k1, (Cr, C), dtype=jnp.float32) * 0.2    # fc1 (1x1 conv)
    w2 = jax.random.normal(k2, (C, Cr), dtype=jnp.float32) * 0.2    # fc2 (1x1 conv)
    wsa_4d = jax.random.normal(k3, (1, 2, KSIZE, KSIZE), dtype=jnp.float32) * 0.1

    # block_batch=2 -> grid=(2,), exercising the multi-step batched pipeline.
    out = cbam_pallas(x, w1, w2, wsa_4d, block_batch=2)
    out = jax.block_until_ready(out)

    ref = cbam_reference(x, w1, w2, wsa_4d)
    assert out.shape == (B, C, H, W)
    max_diff = jnp.max(jnp.abs(out - ref))
    assert jnp.allclose(out, ref, atol=1e-4, rtol=1e-4), \
        f"max abs diff {max_diff}"

    print("KERNEL_OK")
</pallas_src>

<mosaic_0001>
module attributes {stable_mosaic.version = 11 : i64} {
  func.func @cbam_kernel(%arg0: i32, %arg1: memref<2x32x256xf32, #tpu.memory_space<vmem>>, %arg2: memref<32x2xf32, #tpu.memory_space<vmem>>, %arg3: memref<2x32xf32, #tpu.memory_space<vmem>>, %arg4: memref<512x256xf32, #tpu.memory_space<vmem>>, %arg5: memref<2x32x256xf32, #tpu.memory_space<vmem>>) attributes {dimension_semantics = [#tpu.dimension_semantics<parallel>], iteration_bounds = array<i64: 2>, scalar_prefetch = 0 : i64, scratch_operands = 0 : i64, tpu.core_type = #tpu.core_type<tc>, window_params = [{transform_indices = @transform_0, window_bounds = array<i64: 2, 32, 256>}, {pipeline_mode = #tpu.pipeline_mode<synchronous>, transform_indices = @transform_1, window_bounds = array<i64: 32, 2>}, {pipeline_mode = #tpu.pipeline_mode<synchronous>, transform_indices = @transform_2, window_bounds = array<i64: 2, 32>}, {pipeline_mode = #tpu.pipeline_mode<synchronous>, transform_indices = @transform_3, window_bounds = array<i64: 512, 256>}, {transform_indices = @transform_4, window_bounds = array<i64: 2, 32, 256>}]} {
    %c0 = arith.constant 0 : index
    %c0_0 = arith.constant 0 : index
    %c0_1 = arith.constant 0 : index
    %0 = vector.load %arg1[%c0, %c0_0, %c0_1] : memref<2x32x256xf32, #tpu.memory_space<vmem>>, vector<2x32x256xf32>
    %cst = arith.constant dense<0.000000e+00> : vector<2x32xf32>
    %1 = vector.multi_reduction <add>, %0, %cst [2] : vector<2x32x256xf32> to vector<2x32xf32>
    %cst_2 = arith.constant 3.906250e-03 : f32
    %2 = vector.broadcast %cst_2 : f32 to vector<2x32xf32>
    %3 = arith.mulf %1, %2 : vector<2x32xf32>
    %cst_3 = arith.constant dense<0xFF800000> : vector<2x32xf32>
    %4 = vector.multi_reduction <maximumf>, %0, %cst_3 [2] : vector<2x32x256xf32> to vector<2x32xf32>
    %c0_4 = arith.constant 0 : index
    %c0_5 = arith.constant 0 : index
    %5 = vector.load %arg2[%c0_4, %c0_5] : memref<32x2xf32, #tpu.memory_space<vmem>>, vector<32x2xf32>
    %c0_6 = arith.constant 0 : index
    %c0_7 = arith.constant 0 : index
    %6 = vector.load %arg3[%c0_6, %c0_7] : memref<2x32xf32, #tpu.memory_space<vmem>>, vector<2x32xf32>
    %cst_8 = arith.constant dense<0.000000e+00> : vector<2x2xf32>
    %7 = tpu.matmul %3, %5, %cst_8 {dimension_numbers = #tpu.dot_dimension_numbers<[1], [0], [0], [1], [0, 0, 1, 1], [], []>} : vector<2x32xf32>, vector<32x2xf32>, vector<2x2xf32> -> vector<2x2xf32>
    %cst_9 = arith.constant 0.000000e+00 : f32
    %8 = vector.broadcast %cst_9 : f32 to vector<2x2xf32>
    %9 = arith.maximumf %7, %8 : vector<2x2xf32>
    %cst_10 = arith.constant dense<0.000000e+00> : vector<2x32xf32>
    %10 = tpu.matmul %9, %6, %cst_10 {dimension_numbers = #tpu.dot_dimension_numbers<[1], [0], [0], [1], [0, 0, 1, 1], [], []>} : vector<2x2xf32>, vector<2x32xf32>, vector<2x32xf32> -> vector<2x32xf32>
    %cst_11 = arith.constant dense<0.000000e+00> : vector<2x2xf32>
    %11 = tpu.matmul %4, %5, %cst_11 {dimension_numbers = #tpu.dot_dimension_numbers<[1], [0], [0], [1], [0, 0, 1, 1], [], []>} : vector<2x32xf32>, vector<32x2xf32>, vector<2x2xf32> -> vector<2x2xf32>
    %cst_12 = arith.constant 0.000000e+00 : f32
    %12 = vector.broadcast %cst_12 : f32 to vector<2x2xf32>
    %13 = arith.maximumf %11, %12 : vector<2x2xf32>
    %cst_13 = arith.constant dense<0.000000e+00> : vector<2x32xf32>
    %14 = tpu.matmul %13, %6, %cst_13 {dimension_numbers = #tpu.dot_dimension_numbers<[1], [0], [0], [1], [0, 0, 1, 1], [], []>} : vector<2x2xf32>, vector<2x32xf32>, vector<2x32xf32> -> vector<2x32xf32>
    %15 = arith.addf %10, %14 : vector<2x32xf32>
    %cst_14 = arith.constant 0.000000e+00 : f32
    %16 = vector.broadcast %cst_14 : f32 to vector<2x32xf32>
    %17 = arith.subf %16, %15 : vector<2x32xf32>
    %18 = math.exp %17 : vector<2x32xf32>
    %cst_15 = arith.constant 1.000000e+00 : f32
    %19 = vector.broadcast %cst_15 : f32 to vector<2x32xf32>
    %20 = arith.addf %19, %18 : vector<2x32xf32>
    %cst_16 = arith.constant 1.000000e+00 : f32
    %21 = vector.broadcast %cst_16 : f32 to vector<2x32xf32>
    %22 = arith.divf %21, %20 : vector<2x32xf32>
    %23 = vector.shape_cast %22 : vector<2x32xf32> to vector<2x32x1xf32>
    %24 = vector.broadcast %23 : vector<2x32x1xf32> to vector<2x32x256xf32>
    %25 = arith.mulf %0, %24 : vector<2x32x256xf32>
    %cst_17 = arith.constant dense<0.000000e+00> : vector<2x256xf32>
    %26 = vector.multi_reduction <add>, %25, %cst_17 [1] : vector<2x32x256xf32> to vector<2x256xf32>
    %cst_18 = arith.constant 3.125000e-02 : f32
    %27 = vector.broadcast %cst_18 : f32 to vector<2x256xf32>
    %28 = arith.mulf %26, %27 : vector<2x256xf32>
    %cst_19 = arith.constant dense<0xFF800000> : vector<2x256xf32>
    %29 = vector.multi_reduction <maximumf>, %25, %cst_19 [1] : vector<2x32x256xf32> to vector<2x256xf32>
    %30 = tpu.concatenate %28, %29 in 1 : vector<2x256xf32>, vector<2x256xf32> -> vector<2x512xf32>
    %c0_20 = arith.constant 0 : index
    %c0_21 = arith.constant 0 : index
    %31 = vector.load %arg4[%c0_20, %c0_21] : memref<512x256xf32, #tpu.memory_space<vmem>>, vector<512x256xf32>
    %cst_22 = arith.constant dense<0.000000e+00> : vector<2x256xf32>
    %32 = tpu.matmul %30, %31, %cst_22 {dimension_numbers = #tpu.dot_dimension_numbers<[1], [0], [0], [1], [0, 0, 1, 1], [], []>} : vector<2x512xf32>, vector<512x256xf32>, vector<2x256xf32> -> vector<2x256xf32>
    %cst_23 = arith.constant 0.000000e+00 : f32
    %33 = vector.broadcast %cst_23 : f32 to vector<2x256xf32>
    %34 = arith.subf %33, %32 : vector<2x256xf32>
    %35 = math.exp %34 : vector<2x256xf32>
    %cst_24 = arith.constant 1.000000e+00 : f32
    %36 = vector.broadcast %cst_24 : f32 to vector<2x256xf32>
    %37 = arith.addf %36, %35 : vector<2x256xf32>
    %cst_25 = arith.constant 1.000000e+00 : f32
    %38 = vector.broadcast %cst_25 : f32 to vector<2x256xf32>
    %39 = arith.divf %38, %37 : vector<2x256xf32>
    %40 = vector.shape_cast %39 : vector<2x256xf32> to vector<2x1x256xf32>
    %41 = vector.broadcast %40 : vector<2x1x256xf32> to vector<2x32x256xf32>
    %42 = arith.mulf %25, %41 : vector<2x32x256xf32>
    %c0_26 = arith.constant 0 : index
    %c0_27 = arith.constant 0 : index
    %c0_28 = arith.constant 0 : index
    %43 = vector.load %arg5[%c0_26, %c0_27, %c0_28] : memref<2x32x256xf32, #tpu.memory_space<vmem>>, vector<2x32x256xf32>
    tpu.vector_store %arg5[%c0_26, %c0_27, %c0_28], %42 {strides = array<i32>} : memref<2x32x256xf32, #tpu.memory_space<vmem>>, vector<2x32x256xf32>,
    return
  }
  func.func @transform_0(%arg0: i32) -> (i32, i32, i32) {
    %c0_i32 = arith.constant 0 : i32
    %c0_i32_0 = arith.constant 0 : i32
    %c0_i32_1 = arith.constant 0 : i32
    return %arg0, %c0_i32, %c0_i32_0 : i32, i32, i32
  }
  func.func @transform_1(%arg0: i32) -> (i32, i32) {
    %c0_i32 = arith.constant 0 : i32
    %c0_i32_0 = arith.constant 0 : i32
    %c0_i32_1 = arith.constant 0 : i32
    return %c0_i32, %c0_i32_0 : i32, i32
  }
  func.func @transform_2(%arg0: i32) -> (i32, i32) {
    %c0_i32 = arith.constant 0 : i32
    %c0_i32_0 = arith.constant 0 : i32
    %c0_i32_1 = arith.constant 0 : i32
    return %c0_i32, %c0_i32_0 : i32, i32
  }
  func.func @transform_3(%arg0: i32) -> (i32, i32) {
    %c0_i32 = arith.constant 0 : i32
    %c0_i32_0 = arith.constant 0 : i32
    %c0_i32_1 = arith.constant 0 : i32
    return %c0_i32, %c0_i32_0 : i32, i32
  }
  func.func @transform_4(%arg0: i32) -> (i32, i32, i32) {
    %c0_i32 = arith.constant 0 : i32
    %c0_i32_0 = arith.constant 0 : i32
    %c0_i32_1 = arith.constant 0 : i32
    return %arg0, %c0_i32, %c0_i32_0 : i32, i32, i32
  }
}

</mosaic_0001>

<llo_original>
// kernel: tpu_custom_call.1
$region0: #{tpu_custom_call.1}
  #allocation0 [shape = 'u32[]', space=smem, size = 0x4, offset = 0x4, fixed_abs, tag = 'smem constant byte address 0x4 - core index']
  #allocation1 [shape = 'u32[144,128]{1,0:T(1,128)}', space=vmem, size = 0x12000, scoped, tag = 'internal scratch']
  %s0 = inlined_call_operand.hbm [shape: f32[4,32,256], index: 0, kind: input, shape index: {}]
  %s1 = inlined_call_operand.vmem [shape: f32[32,2], index: 1, kind: input, shape index: {}]
  %s2 = inlined_call_operand.vmem [shape: f32[2,32], index: 2, kind: input, shape index: {}]
  %s3 = inlined_call_operand.hbm [shape: f32[512,256], index: 3, kind: input, shape index: {}]
  %s4 = inlined_call_operand.hbm [shape: f32[4,32,256], index: 4, kind: output, shape index: {}]
  %s5 = sld [smem:[#allocation0]]
  $region57: #{tpu_custom_call.1} parent=0
    _
  %s7 = ssub.s32 1, %s5
  %s8 = scalar_select 0, %s7, %s5
  $region1: #{tpu_custom_call.1} parent=0
    #allocation2 [shape = 'u8[131072]{0}', space=vmem, size = 0x20000, scoped, tag = 'input window, operand 0']
    #allocation3 [shape = 's32[2]{0}', space=sflag, size = 0x8, scoped, tag = 'scoped memory for tpu_custom_call.1']
    #allocation4 [shape = 's32[2]{0}', space=sflag, size = 0x8, scoped, tag = 'scoped memory for tpu_custom_call.1']
    #allocation5 [shape = 'u8[524288]{0}', space=vmem, size = 0x80000, scoped, tag = 'input window, operand 3, single buffered']
    #allocation6 [shape = 's32[1]{0}', space=sflag, size = 0x4, scoped, tag = 'scoped memory for tpu_custom_call.1']
    #allocation7 [shape = 'u8[131072]{0}', space=vmem, size = 0x20000, scoped, tag = 'output window, operand 0']
    %9 = vsyncpa [#allocation3], 0
    %s10 = scalar_lea.sflag [#allocation3], 1
    %11 = vsyncpa %s10, 0
    %12 = vsyncpa [#allocation6], 0
    %13 = vsyncpa [#allocation4], 0
    %s14 = scalar_lea.sflag [#allocation4], 1
    %15 = vsyncpa %s14, 0
    loop: start=0, step=1, limit=4
    $region2: #{tpu_custom_call.1} parent=1 // loop_pre_header
      _
    $region3: #{tpu_custom_call.1} parent=1 // loop_header
      %s17 = sphi 0, %s21
      %p18 = scmp.ge.s32.totalorder %s17, 4
      %s27 = sphi 0, %s29
      %s30 = sphi 0, %s27
      %s31 = sphi 0, %s30
      %s47 = sphi 0, %s31
      %s51 = sphi 0, %s51
      %s53 = sphi 0, %s51
      %s54 = sphi 0, %s53
      %s68 = sphi 0, %s54
      %s72 = sphi 0, %s72
      %s74 = sphi 0, %s72
      %s75 = sphi 0, %s74
      %s89 = sphi 0, %s75
      %s93 = sphi 0, %s93
      %s95 = sphi 0, %s93
      %s96 = sphi 0, %s95
      %s110 = sphi 0, %s96
      %s116 = sphi 0, %s118
      %s119 = sphi 0, %s116
      %s120 = sphi 0, %s119
      %s136 = sphi 0, %s120
    $region4: #{tpu_custom_call.1} parent=1 // loop_header_branch
      %20 = sbr.rel (%p18) target = $region8
    $region5: #{tpu_custom_call.1} parent=1 // loop_body
      %s22 = ssub.s32 %s17, 1
      %s23 = ssub.s32 %s17, 2
      %s24 = sadd.s32 %s17, 1
      %s25 = ssub.s32 %s17, %s24
      %p26 = scmp.eq.s32.totalorder %s25, 0
      %s28 = sadd.s32 %s27, 1
      %s29 = scalar_select %p26, %s27, %s28
      %p32 = pneg %p26
      %p33 = scmp.eq.s32.totalorder %s17, 1
      %p34 = por %p32, %p33
      %p35 = scmp.ne.s32.totalorder %s27, %s30
      %p36 = scmp.eq.s32.totalorder %s17, 0
      %p37 = por %p35, %p36
      %p38 = scmp.ne.s32.totalorder %s27, %s30
      %p39 = scmp.eq.s32.totalorder %s22, 1
      %p40 = por %p38, %p39
      %p41 = scmp.ne.s32.totalorder %s30, %s31
      %p42 = scmp.eq.s32.totalorder %s22, 0
      %p43 = por %p41, %p42
      %p44 = scmp.ne.s32.totalorder %s30, %s31
      %p45 = scmp.eq.s32.totalorder %s23, 1
      %p46 = por %p44, %p45
      %p48 = scmp.ne.s32.totalorder %s31, %s47
      %p49 = scmp.eq.s32.totalorder %s23, 0
      %p50 = por %p48, %p49
      %s52 = sadd.s32 %s51, 1
      %p55 = scmp.eq.s32.totalorder %s17, 1
      %p56 = scmp.ne.s32.totalorder %s51, %s53
      %p57 = scmp.eq.s32.totalorder %s17, 0
      %p58 = por %p56, %p57
      %p59 = scmp.ne.s32.totalorder %s51, %s53
      %p60 = scmp.eq.s32.totalorder %s22, 1
      %p61 = por %p59, %p60
      %p62 = scmp.ne.s32.totalorder %s53, %s54
      %p63 = scmp.eq.s32.totalorder %s22, 0
      %p64 = por %p62, %p63
      %p65 = scmp.ne.s32.totalorder %s53, %s54
      %p66 = scmp.eq.s32.totalorder %s23, 1
      %p67 = por %p65, %p66
      %p69 = scmp.ne.s32.totalorder %s54, %s68
      %p70 = scmp.eq.s32.totalorder %s23, 0
      %p71 = por %p69, %p70
      %s73 = sadd.s32 %s72, 1
      %p76 = scmp.eq.s32.totalorder %s17, 1
      %p77 = scmp.ne.s32.totalorder %s72, %s74
      %p78 = scmp.eq.s32.totalorder %s17, 0
      %p79 = por %p77, %p78
      %p80 = scmp.ne.s32.totalorder %s72, %s74
      %p81 = scmp.eq.s32.totalorder %s22, 1
      %p82 = por %p80, %p81
      %p83 = scmp.ne.s32.totalorder %s74, %s75
      %p84 = scmp.eq.s32.totalorder %s22, 0
      %p85 = por %p83, %p84
      %p86 = scmp.ne.s32.totalorder %s74, %s75
      %p87 = scmp.eq.s32.totalorder %s23, 1
      %p88 = por %p86, %p87
      %p90 = scmp.ne.s32.totalorder %s75, %s89
      %p91 = scmp.eq.s32.totalorder %s23, 0
      %p92 = por %p90, %p91
      %s94 = sadd.s32 %s93, 1
      %p97 = scmp.eq.s32.totalorder %s17, 1
      %p98 = scmp.ne.s32.totalorder %s93, %s95
      %p99 = scmp.eq.s32.totalorder %s17, 0
      %p100 = por %p98, %p99
      %p101 = scmp.ne.s32.totalorder %s93, %s95
      %p102 = scmp.eq.s32.totalorder %s22, 1
      %p103 = por %p101, %p102
      %p104 = scmp.ne.s32.totalorder %s95, %s96
      %p105 = scmp.eq.s32.totalorder %s22, 0
      %p106 = por %p104, %p105
      %p107 = scmp.ne.s32.totalorder %s95, %s96
      %p108 = scmp.eq.s32.totalorder %s23, 1
      %p109 = por %p107, %p108
      %p111 = scmp.ne.s32.totalorder %s96, %s110
      %p112 = scmp.eq.s32.totalorder %s23, 0
      %p113 = por %p111, %p112
      %s114 = ssub.s32 %s17, %s24
      %p115 = scmp.eq.s32.totalorder %s114, 0
      %s117 = sadd.s32 %s116, 1
      %s118 = scalar_select %p115, %s116, %s117
      %p121 = pneg %p115
      %p122 = scmp.eq.s32.totalorder %s17, 1
      %p123 = por %p121, %p122
      %p124 = scmp.ne.s32.totalorder %s116, %s119
      %p125 = scmp.eq.s32.totalorder %s17, 0
      %p126 = por %p124, %p125
      %p127 = scmp.ne.s32.totalorder %s116, %s119
      %p128 = scmp.eq.s32.totalorder %s22, 1
      %p129 = por %p127, %p128
      %p130 = scmp.ne.s32.totalorder %s119, %s120
      %p131 = scmp.eq.s32.totalorder %s22, 0
      %p132 = por %p130, %p131
      %p133 = scmp.ne.s32.totalorder %s119, %s120
      %p134 = scmp.eq.s32.totalorder %s23, 1
      %p135 = por %p133, %p134
      %p137 = scmp.ne.s32.totalorder %s120, %s136
      %p138 = scmp.eq.s32.totalorder %s23, 0
      %p139 = por %p137, %p138
      %p140 = scmp.le.s32.totalorder 1, %s17
      %p141 = scmp.lt.s32.totalorder %s17, 3
      %p142 = pnand %p140, %p141
      %p143 = pneg %p142
      // Predicated region
      $region9: #{tpu_custom_call.1} parent=5 // pred_check
        _
      $region10: #{tpu_custom_call.1} parent=5 // pred_check_branch
        %145 = sbr.rel (%p142) target = $region12
      $region11: #{tpu_custom_call.1} parent=5 // pred_region
        %s146 = ssub.s32 %s17, 1
        // Predicated region
        $region13: #{tpu_custom_call.1} parent=11 // pred_check
          %p147 = pneg %p64
        $region14: #{tpu_custom_call.1} parent=11 // pred_check_branch
          %149 = sbr.rel (%p147) target = $region16
        $region15: #{tpu_custom_call.1} parent=11 // pred_region
          _
        $region16: #{tpu_custom_call.1} parent=11 // pred_fallthru
          _
        // Predicated region
        $region17: #{tpu_custom_call.1} parent=11 // pred_check
          %p150 = pneg %p85
        $region18: #{tpu_custom_call.1} parent=11 // pred_check_branch
          %152 = sbr.rel (%p150) target = $region20
        $region19: #{tpu_custom_call.1} parent=11 // pred_region
          _
        $region20: #{tpu_custom_call.1} parent=11 // pred_fallthru
          _
        // Predicated region
        $region21: #{tpu_custom_call.1} parent=11 // pred_check
          %p153 = pneg %p106
        $region22: #{tpu_custom_call.1} parent=11 // pred_check_branch
          %155 = sbr.rel (%p153) target = $region24
        $region23: #{tpu_custom_call.1} parent=11 // pred_region
          %s157 = ssub.s32 16384, 16384
          %158 = vsyncadd [#allocation6], %s157
          %s159 = sshll.u32 [#allocation5], 4
          %s160 = int_to_ptr.vmem [resolvable:$true] %s159
          %165 = dma.hbm_to_vmem [thread:$0]  %s3, 16384, %s160, [#allocation6], 256, 256, 16
        $region24: #{tpu_custom_call.1} parent=11 // pred_fallthru
          _
      $region12: #{tpu_custom_call.1} parent=5 // pred_fallthru
        _
      %p166 = scmp.lt.s32.totalorder %s17, 2
      // Predicated region
      $region25: #{tpu_custom_call.1} parent=5 // pred_check
        %p167 = pneg %p166
      $region26: #{tpu_custom_call.1} parent=5 // pred_check_branch
        %169 = sbr.rel (%p167) target = $region28
      $region27: #{tpu_custom_call.1} parent=5 // pred_region
        // Predicated region
        $region29: #{tpu_custom_call.1} parent=27 // pred_check
          %p170 = pneg %p37
        $region30: #{tpu_custom_call.1} parent=27 // pred_check_branch
          %172 = sbr.rel (%p170) target = $region32
        $region31: #{tpu_custom_call.1} parent=27 // pred_region
          %s173 = sand.u32 %s27, 1
          %s174 = scalar_lea.sflag [#allocation3], %s173
          %s175 = sand.u32 %s27, 1
          %s176 = smul.addr %s175, 128
          %s177 = scalar_lea.vmem [#allocation2], %s176
          %s178 = smul.u32 2, %s17
          %s180 = ssub.s32 2048, 2048
          %181 = vsyncadd %s174, %s180
          %s182 = smul.addr %s178, 8
          %s183 = smul.addr %s182, 128
          %s184 = scalar_lea.hbm %s0, %s183
          %s185 = sshll.u32 %s177, 4
          %s186 = int_to_ptr.vmem [resolvable:$true] %s185
          %191 = dma.hbm_to_vmem [thread:$0]  %s184, 2048, %s186, %s174, 256, 256, 16
        $region32: #{tpu_custom_call.1} parent=27 // pred_fallthru
          _
      $region28: #{tpu_custom_call.1} parent=5 // pred_fallthru
        _
      %p192 = scmp.le.s32.totalorder 1, %s17
      %p193 = scmp.lt.s32.totalorder %s17, 3
      %p194 = pnand %p192, %p193
      %p195 = pneg %p194
      // Predicated region
      $region33: #{tpu_custom_call.1} parent=5 // pred_check
        _
      $region34: #{tpu_custom_call.1} parent=5 // pred_check_branch
        %197 = sbr.rel (%p194) target = $region36
      $region35: #{tpu_custom_call.1} parent=5 // pred_region
        %s198 = ssub.s32 %s17, 1
        %s199 = sand.u32 %s30, 1
        %s200 = scalar_lea.sflag [#allocation3], %s199
        %s201 = sand.u32 %s30, 1
        %s202 = smul.addr %s201, 128
        %s203 = scalar_lea.vmem [#allocation2], %s202
        // Predicated region
        $region37: #{tpu_custom_call.1} parent=35 // pred_check
          %p204 = pneg %p43
        $region38: #{tpu_custom_call.1} parent=35 // pred_check_branch
          %206 = sbr.rel (%p204) target = $region40
        $region39: #{tpu_custom_call.1} parent=35 // pred_region
          %207 = dma.done %s200, 2048
        $region40: #{tpu_custom_call.1} parent=35 // pred_fallthru
          _
        // Predicated region
        $region41: #{tpu_custom_call.1} parent=35 // pred_check
          %p208 = pneg %p106
        $region42: #{tpu_custom_call.1} parent=35 // pred_check_branch
          %210 = sbr.rel (%p208) target = $region44
        $region43: #{tpu_custom_call.1} parent=35 // pred_region
          %211 = dma.done [#allocation6], 16384
        $region44: #{tpu_custom_call.1} parent=35 // pred_fallthru
          _
        %s212 = sand.u32 %s30, 1
        %s213 = scalar_lea.sflag [#allocation3], %s212
        %s214 = sand.u32 %s30, 1
        %s215 = smul.addr %s214, 128
        %s216 = scalar_lea.vmem [#allocation2], %s215
        %p217 = pneg %p43
        %p218 = pneg %p40
        %p219 = pneg %p64
        %p220 = pneg %p61
        %p221 = pneg %p85
        %p222 = pneg %p82
        %p223 = pneg %p106
        %p224 = pneg %p103
        %p225 = pneg %p132
        %p226 = pneg %p129
        %s227 = sand.u32 %s119, 1
        %s228 = scalar_lea.sflag [#allocation4], %s227
        %s229 = sand.u32 %s119, 1
        %s230 = smul.addr %s229, 128
        %s231 = scalar_lea.vmem [#allocation7], %s230
        %s232 = smul.u32 2, %s22
        %s233 = smul.u32 2, %s22
        %v234 = vld [vmem:[%s203] sm:$0xff]
        %v235 = vld [vmem:[%s203 + $0x8] sm:$0xff]
        %v236 = vld [vmem:[%s203 + $0x10] sm:$0xff]
        %v237 = vld [vmem:[%s203 + $0x18] sm:$0xff]
        %v238 = vld [vmem:[%s203 + $0x20] sm:$0xff]
        %v239 = vld [vmem:[%s203 + $0x28] sm:$0xff]
        %v240 = vld [vmem:[%s203 + $0x30] sm:$0xff]
        %v241 = vld [vmem:[%s203 + $0x38] sm:$0xff]
        %v242 = vld [vmem:[%s203 + $0x40] sm:$0xff]
        %v243 = vld [vmem:[%s203 + $0x48] sm:$0xff]
        %v244 = vld [vmem:[%s203 + $0x50] sm:$0xff]
        %v245 = vld [vmem:[%s203 + $0x58] sm:$0xff]
        %v246 = vld [vmem:[%s203 + $0x60] sm:$0xff]
        %v247 = vld [vmem:[%s203 + $0x68] sm:$0xff]
        %v248 = vld [vmem:[%s203 + $0x70] sm:$0xff]
        %v249 = vld [vmem:[%s203 + $0x78] sm:$0xff]
        %v250 = vadd.f32 %v234, %v235
        %251 = vadd.xlane.f32.xlu0 %v250
        %v252 = vpop.xlane.xlu0 %251
        %v253 = vadd.f32 %v236, %v237
        %254 = vadd.xlane.f32.xlu0 %v253
        %v255 = vpop.xlane.xlu0 %254
        %v256 = vadd.f32 %v238, %v239
        %257 = vadd.xlane.f32.xlu0 %v256
        %v258 = vpop.xlane.xlu0 %257
        %v259 = vadd.f32 %v240, %v241
        %260 = vadd.xlane.f32.xlu0 %v259
        %v261 = vpop.xlane.xlu0 %260
        %v262 = vadd.f32 %v242, %v243
        %263 = vadd.xlane.f32.xlu0 %v262
        %v264 = vpop.xlane.xlu0 %263
        %v265 = vadd.f32 %v244, %v245
        %266 = vadd.xlane.f32.xlu0 %v265
        %v267 = vpop.xlane.xlu0 %266
        %v268 = vadd.f32 %v246, %v247
        %269 = vadd.xlane.f32.xlu0 %v268
        %v270 = vpop.xlane.xlu0 %269
        %v271 = vadd.f32 %v248, %v249
        %272 = vadd.xlane.f32.xlu0 %v271
        %v273 = vpop.xlane.xlu0 %272
        %v274 = vmul.f32 %v252, 0.00390625
        %v275 = vmul.f32 %v255, 0.00390625
        %v276 = vmul.f32 %v258, 0.00390625
        %v277 = vmul.f32 %v261, 0.00390625
        %v278 = vmul.f32 %v264, 0.00390625
        %v279 = vmul.f32 %v267, 0.00390625
        %v280 = vmul.f32 %v270, 0.00390625
        %v281 = vmul.f32 %v273, 0.00390625
        %v282 = vmax.f32 %v234, %v235
        %283 = vmax.xlane.f32.xlu0 %v282
        %v284 = vpop.xlane.xlu0 %283
        %v285 = vmax.f32 %v236, %v237
        %286 = vmax.xlane.f32.xlu0 %v285
        %v287 = vpop.xlane.xlu0 %286
        %v288 = vmax.f32 %v238, %v239
        %289 = vmax.xlane.f32.xlu0 %v288
        %v290 = vpop.xlane.xlu0 %289
        %v291 = vmax.f32 %v240, %v241
        %292 = vmax.xlane.f32.xlu0 %v291
        %v293 = vpop.xlane.xlu0 %292
        %v294 = vmax.f32 %v242, %v243
        %295 = vmax.xlane.f32.xlu0 %v294
        %v296 = vpop.xlane.xlu0 %295
        %v297 = vmax.f32 %v244, %v245
        %298 = vmax.xlane.f32.xlu0 %v297
        %v299 = vpop.xlane.xlu0 %298
        %v300 = vmax.f32 %v246, %v247
        %301 = vmax.xlane.f32.xlu0 %v300
        %v302 = vpop.xlane.xlu0 %301
        %v303 = vmax.f32 %v248, %v249
        %304 = vmax.xlane.f32.xlu0 %v303
        %v305 = vpop.xlane.xlu0 %304
        %v306 = vld [vmem:[%s1] sm:$0xff]
        %v307 = vld [vmem:[%s1 + $0x8] sm:$0xff]
        %v308 = vld [vmem:[%s1 + $0x10] sm:$0xff]
        %v309 = vld [vmem:[%s1 + $0x18] sm:$0xff]
        %v310 = vld [vmem:[%s2] sm:$0x3]
        %v319 = vlaneseq
        %v320 = vand.u32 %v319, 127
        %v321 = vlaneseq
        %v322 = vshrl.u32 %v321, 7
        %v323 = vsub.s32 %v320, %v322
        %v324 = vrot.slane %v274, %v323
        %v325 = vadd.s32 %v320, 4294967288
        %v326 = vlaneseq
        %v327 = vshrl.u32 %v326, 7
        %v328 = vsub.s32 %v325, %v327
        %v329 = vrot.slane %v275, %v328
        %vm330 = vcmask 130112
        %v331 = vsel %vm330, %v329, %v324
        %v332 = vadd.s32 %v320, 4294967280
        %v333 = vlaneseq
        %v334 = vshrl.u32 %v333, 7
        %v335 = vsub.s32 %v332, %v334
        %v336 = vrot.slane %v276, %v335
        %vm337 = vcmask 195712
        %v338 = vsel %vm337, %v336, %v331
        %v339 = vadd.s32 %v320, 4294967272
        %v340 = vlaneseq
        %v341 = vshrl.u32 %v340, 7
        %v342 = vsub.s32 %v339, %v341
        %v343 = vrot.slane %v277, %v342
        %vm344 = vcmask 261312
        %v345 = vsel %vm344, %v343, %v338
        %v346 = vlaneseq
        %v347 = vshrl.u32 %v346, 7
        %v348 = vsub.s32 %v320, %v347
        %v349 = vrot.slane %v278, %v348
        %v350 = vlaneseq
        %v351 = vshrl.u32 %v350, 7
        %v352 = vsub.s32 %v325, %v351
        %v353 = vrot.slane %v279, %v352
        %v354 = vsel %vm330, %v353, %v349
        %v355 = vlaneseq
        %v356 = vshrl.u32 %v355, 7
        %v357 = vsub.s32 %v332, %v356
        %v358 = vrot.slane %v280, %v357
        %v359 = vsel %vm337, %v358, %v354
        %v360 = vlaneseq
        %v361 = vshrl.u32 %v360, 7
        %v362 = vsub.s32 %v339, %v361
        %v363 = vrot.slane %v281, %v362
        %v364 = vsel %vm344, %v363, %v359
        %vm365 = vcmask 1041409
        %v366 = vsel %vm365, %v364, %v345
        %vm367 = vcmask 261120
        %v368 = vsel %vm367, %v366, 0
        %370 = vmatprep.subr.mxu0 0.0
        %371 = vmatpush1.msra.mxu0 %v306
        %372 = vmatprep.subr.mxu0 0.0
        %373 = vmatpush1.msra.mxu0 %v307
        %374 = vmatprep.subr.mxu0 0.0
        %375 = vmatpush1.msra.mxu0 %v308
        %376 = vmatprep.subr.mxu0 0.0
        %377 = vmatpush1.msra.mxu0 %v309
        %378 = vmatprep.subr.mxu0 0.0
        %379 = vmatpush1.msra.mxu0 0.0
        %380 = vmatprep.subr.mxu0 0.0
        %381 = vmatpush1.msra.mxu0 0.0
        %382 = vmatprep.subr.mxu0 0.0
        %383 = vmatpush1.msra.mxu0 0.0
        %384 = vmatprep.subr.mxu0 0.0
        %385 = vmatpush1.msra.mxu0 0.0
        %386 = vmatprep.subr.mxu0 0.0
        %387 = vmatpush1.msra.mxu0 0.0
        %388 = vmatprep.subr.mxu0 0.0
        %389 = vmatpush1.msra.mxu0 0.0
        %390 = vmatprep.subr.mxu0 0.0
        %391 = vmatpush1.msra.mxu0 0.0
        %392 = vmatprep.subr.mxu0 0.0
        %393 = vmatpush1.msra.mxu0 0.0
        %394 = vmatprep.subr.mxu0 0.0
        %395 = vmatpush1.msra.mxu0 0.0
        %396 = vmatprep.subr.mxu0 0.0
        %397 = vmatpush1.msra.mxu0 0.0
        %398 = vmatprep.subr.mxu0 0.0
        %399 = vmatpush1.msra.mxu0 0.0
        %400 = vmatprep.subr.mxu0 0.0
        %401 = vmatpush1.msra.mxu0 0.0
        %402 = vmatprep.subr.mxu0 0.0
        %403 = vmatpush1.msra.mxu0 0.0
        %404 = vmatprep.subr.mxu0 0.0
        %405 = vmatpush1.msra.mxu0 0.0
        %406 = vmatprep.subr.mxu0 0.0
        %407 = vmatpush1.msra.mxu0 0.0
        %408 = vmatprep.subr.mxu0 0.0
        %409 = vmatpush1.msra.mxu0 0.0
        %410 = vmatprep.subr.mxu0 0.0
        %411 = vmatpush1.msra.mxu0 0.0
        %412 = vmatprep.subr.mxu0 0.0
        %413 = vmatpush1.msra.mxu0 0.0
        %414 = vmatprep.subr.mxu0 0.0
        %415 = vmatpush1.msra.mxu0 0.0
        %416 = vmatprep.subr.mxu0 0.0
        %417 = vmatpush1.msra.mxu0 0.0
        %418 = vmatprep.subr.mxu0 0.0
        %419 = vmatpush1.msra.mxu0 0.0
        %420 = vmatprep.subr.mxu0 0.0
        %421 = vmatpush1.msra.mxu0 0.0
        %422 = vmatprep.subr.mxu0 0.0
        %423 = vmatpush1.msra.mxu0 0.0
        %424 = vmatprep.subr.mxu0 0.0
        %425 = vmatpush1.msra.mxu0 0.0
        %426 = vmatprep.subr.mxu0 0.0
        %427 = vmatpush1.msra.mxu0 0.0
        %428 = vmatprep.subr.mxu0 0.0
        %429 = vmatpush1.msra.mxu0 0.0
        %430 = vmatprep.subr.mxu0 0.0
        %431 = vmatpush1.msra.mxu0 0.0
        %432 = vmatprep.subr.mxu0 0.0
        %433 = vmatpush1.msra.mxu0 0.0
        %434 = vmatprep.mubr.f32.mxu0 0.0
        %435 = vmatmul.mubr.f32.gmra.mrb[0].mxu0 %v368
        %v436 = vpop.f32.mrb[0].mxu0
        %v437 = vadd.f32 0.0, %v436
        %v438 = vpop.f32.mrb[0].mxu0
        %439 = vdwg.mxu0
        %v440 = vmax.f32 %v437, 0.0
        %v449 = vlaneseq
        %v450 = vshrl.u32 %v449, 7
        %v451 = vsub.s32 %v320, %v450
        %v452 = vrot.slane %v284, %v451
        %v453 = vlaneseq
        %v454 = vshrl.u32 %v453, 7
        %v455 = vsub.s32 %v325, %v454
        %v456 = vrot.slane %v287, %v455
        %v457 = vsel %vm330, %v456, %v452
        %v458 = vlaneseq
        %v459 = vshrl.u32 %v458, 7
        %v460 = vsub.s32 %v332, %v459
        %v461 = vrot.slane %v290, %v460
        %v462 = vsel %vm337, %v461, %v457
        %v463 = vlaneseq
        %v464 = vshrl.u32 %v463, 7
        %v465 = vsub.s32 %v339, %v464
        %v466 = vrot.slane %v293, %v465
        %v467 = vsel %vm344, %v466, %v462
        %v468 = vlaneseq
        %v469 = vshrl.u32 %v468, 7
        %v470 = vsub.s32 %v320, %v469
        %v471 = vrot.slane %v296, %v470
        %v472 = vlaneseq
        %v473 = vshrl.u32 %v472, 7
        %v474 = vsub.s32 %v325, %v473
        %v475 = vrot.slane %v299, %v474
        %v476 = vsel %vm330, %v475, %v471
        %v477 = vlaneseq
        %v478 = vshrl.u32 %v477, 7
        %v479 = vsub.s32 %v332, %v478
        %v480 = vrot.slane %v302, %v479
        %v481 = vsel %vm337, %v480, %v476
        %v482 = vlaneseq
        %v483 = vshrl.u32 %v482, 7
        %v484 = vsub.s32 %v339, %v483
        %v485 = vrot.slane %v305, %v484
        %v486 = vsel %vm344, %v485, %v481
        %v487 = vsel %vm365, %v486, %v467
        %v488 = vsel %vm367, %v487, 0
        %490 = vmatprep.subr.mxu0 0.0
        %491 = vmatpush1.msra.mxu0 %v306
        %492 = vmatprep.subr.mxu0 0.0
        %493 = vmatpush1.msra.mxu0 %v307
        %494 = vmatprep.subr.mxu0 0.0
        %495 = vmatpush1.msra.mxu0 %v308
        %496 = vmatprep.subr.mxu0 0.0
        %497 = vmatpush1.msra.mxu0 %v309
        %498 = vmatprep.subr.mxu0 0.0
        %499 = vmatpush1.msra.mxu0 0.0
        %500 = vmatprep.subr.mxu0 0.0
        %501 = vmatpush1.msra.mxu0 0.0
        %502 = vmatprep.subr.mxu0 0.0
        %503 = vmatpush1.msra.mxu0 0.0
        %504 = vmatprep.subr.mxu0 0.0
        %505 = vmatpush1.msra.mxu0 0.0
        %506 = vmatprep.subr.mxu0 0.0
        %507 = vmatpush1.msra.mxu0 0.0
        %508 = vmatprep.subr.mxu0 0.0
        %509 = vmatpush1.msra.mxu0 0.0
        %510 = vmatprep.subr.mxu0 0.0
        %511 = vmatpush1.msra.mxu0 0.0
        %512 = vmatprep.subr.mxu0 0.0
        %513 = vmatpush1.msra.mxu0 0.0
        %514 = vmatprep.subr.mxu0 0.0
        %515 = vmatpush1.msra.mxu0 0.0
        %516 = vmatprep.subr.mxu0 0.0
        %517 = vmatpush1.msra.mxu0 0.0
        %518 = vmatprep.subr.mxu0 0.0
        %519 = vmatpush1.msra.mxu0 0.0
        %520 = vmatprep.subr.mxu0 0.0
        %521 = vmatpush1.msra.mxu0 0.0
        %522 = vmatprep.subr.mxu0 0.0
        %523 = vmatpush1.msra.mxu0 0.0
        %524 = vmatprep.subr.mxu0 0.0
        %525 = vmatpush1.msra.mxu0 0.0
        %526 = vmatprep.subr.mxu0 0.0
        %527 = vmatpush1.msra.mxu0 0.0
        %528 = vmatprep.subr.mxu0 0.0
        %529 = vmatpush1.msra.mxu0 0.0
        %530 = vmatprep.subr.mxu0 0.0
        %531 = vmatpush1.msra.mxu0 0.0
        %532 = vmatprep.subr.mxu0 0.0
        %533 = vmatpush1.msra.mxu0 0.0
        %534 = vmatprep.subr.mxu0 0.0
        %535 = vmatpush1.msra.mxu0 0.0
        %536 = vmatprep.subr.mxu0 0.0
        %537 = vmatpush1.msra.mxu0 0.0
        %538 = vmatprep.subr.mxu0 0.0
        %539 = vmatpush1.msra.mxu0 0.0
        %540 = vmatprep.subr.mxu0 0.0
        %541 = vmatpush1.msra.mxu0 0.0
        %542 = vmatprep.subr.mxu0 0.0
        %543 = vmatpush1.msra.mxu0 0.0
        %544 = vmatprep.subr.mxu0 0.0
        %545 = vmatpush1.msra.mxu0 0.0
        %546 = vmatprep.subr.mxu0 0.0
        %547 = vmatpush1.msra.mxu0 0.0
        %548 = vmatprep.subr.mxu0 0.0
        %549 = vmatpush1.msra.mxu0 0.0
        %550 = vmatprep.subr.mxu0 0.0
        %551 = vmatpush1.msra.mxu0 0.0
        %552 = vmatprep.subr.mxu0 0.0
        %553 = vmatpush1.msra.mxu0 0.0
        %554 = vmatprep.mubr.f32.mxu0 0.0
        %555 = vmatmul.mubr.f32.gmra.mrb[0].mxu0 %v488
        %v556 = vpop.f32.mrb[0].mxu0
        %v557 = vadd.f32 0.0, %v556
        %v558 = vpop.f32.mrb[0].mxu0
        %559 = vdwg.mxu0
        %v560 = vmax.f32 %v557, 0.0
        %vm561 = vcmask 15360
        %v563 = vsel %vm561, %v560, 0
        %vm565 = vcmask 1041408
        %v567 = vsel %vm565, %v310, 0
        %569 = vmatprep.subr.mxu0 0.0
        %570 = vmatpush1.msra.mxu0 %v567
        %571 = vmatprep.subr.mxu0 0.0
        %572 = vmatpush1.msra.mxu0 0.0
        %573 = vmatprep.subr.mxu0 0.0
        %574 = vmatpush1.msra.mxu0 0.0
        %575 = vmatprep.subr.mxu0 0.0
        %576 = vmatpush1.msra.mxu0 0.0
        %577 = vmatprep.subr.mxu0 0.0
        %578 = vmatpush1.msra.mxu0 0.0
        %579 = vmatprep.subr.mxu0 0.0
        %580 = vmatpush1.msra.mxu0 0.0
        %581 = vmatprep.subr.mxu0 0.0
        %582 = vmatpush1.msra.mxu0 0.0
        %583 = vmatprep.subr.mxu0 0.0
        %584 = vmatpush1.msra.mxu0 0.0
        %585 = vmatprep.subr.mxu0 0.0
        %586 = vmatpush1.msra.mxu0 0.0
        %587 = vmatprep.subr.mxu0 0.0
        %588 = vmatpush1.msra.mxu0 0.0
        %589 = vmatprep.subr.mxu0 0.0
        %590 = vmatpush1.msra.mxu0 0.0
        %591 = vmatprep.subr.mxu0 0.0
        %592 = vmatpush1.msra.mxu0 0.0
        %593 = vmatprep.subr.mxu0 0.0
        %594 = vmatpush1.msra.mxu0 0.0
        %595 = vmatprep.subr.mxu0 0.0
        %596 = vmatpush1.msra.mxu0 0.0
        %597 = vmatprep.subr.mxu0 0.0
        %598 = vmatpush1.msra.mxu0 0.0
        %599 = vmatprep.subr.mxu0 0.0
        %600 = vmatpush1.msra.mxu0 0.0
        %601 = vmatprep.subr.mxu0 0.0
        %602 = vmatpush1.msra.mxu0 0.0
        %603 = vmatprep.subr.mxu0 0.0
        %604 = vmatpush1.msra.mxu0 0.0
        %605 = vmatprep.subr.mxu0 0.0
        %606 = vmatpush1.msra.mxu0 0.0
        %607 = vmatprep.subr.mxu0 0.0
        %608 = vmatpush1.msra.mxu0 0.0
        %609 = vmatprep.subr.mxu0 0.0
        %610 = vmatpush1.msra.mxu0 0.0
        %611 = vmatprep.subr.mxu0 0.0
        %612 = vmatpush1.msra.mxu0 0.0
        %613 = vmatprep.subr.mxu0 0.0
        %614 = vmatpush1.msra.mxu0 0.0
        %615 = vmatprep.subr.mxu0 0.0
        %616 = vmatpush1.msra.mxu0 0.0
        %617 = vmatprep.subr.mxu0 0.0
        %618 = vmatpush1.msra.mxu0 0.0
        %619 = vmatprep.subr.mxu0 0.0
        %620 = vmatpush1.msra.mxu0 0.0
        %621 = vmatprep.subr.mxu0 0.0
        %622 = vmatpush1.msra.mxu0 0.0
        %623 = vmatprep.subr.mxu0 0.0
        %624 = vmatpush1.msra.mxu0 0.0
        %625 = vmatprep.subr.mxu0 0.0
        %626 = vmatpush1.msra.mxu0 0.0
        %627 = vmatprep.subr.mxu0 0.0
        %628 = vmatpush1.msra.mxu0 0.0
        %629 = vmatprep.subr.mxu0 0.0
        %630 = vmatpush1.msra.mxu0 0.0
        %631 = vmatprep.subr.mxu0 0.0
        %632 = vmatpush1.msra.mxu0 0.0
        %633 = vmatprep.mubr.f32.mxu0 0.0
        %634 = vmatmul.mubr.f32.gmra.mrb[0].mxu0 %v563
        %v635 = vpop.f32.mrb[0].mxu0
        %v636 = vadd.f32 0.0, %v635
        %v637 = vpop.f32.mrb[0].mxu0
        %638 = vdwg.mxu0
        %v640 = vsel %vm561, %v440, 0
        %642 = vmatprep.subr.mxu0 0.0
        %643 = vmatpush1.msra.mxu0 %v567
        %644 = vmatprep.subr.mxu0 0.0
        %645 = vmatpush1.msra.mxu0 0.0
        %646 = vmatprep.subr.mxu0 0.0
        %647 = vmatpush1.msra.mxu0 0.0
        %648 = vmatprep.subr.mxu0 0.0
        %649 = vmatpush1.msra.mxu0 0.0
        %650 = vmatprep.subr.mxu0 0.0
        %651 = vmatpush1.msra.mxu0 0.0
        %652 = vmatprep.subr.mxu0 0.0
        %653 = vmatpush1.msra.mxu0 0.0
        %654 = vmatprep.subr.mxu0 0.0
        %655 = vmatpush1.msra.mxu0 0.0
        %656 = vmatprep.subr.mxu0 0.0
        %657 = vmatpush1.msra.mxu0 0.0
        %658 = vmatprep.subr.mxu0 0.0
        %659 = vmatpush1.msra.mxu0 0.0
        %660 = vmatprep.subr.mxu0 0.0
        %661 = vmatpush1.msra.mxu0 0.0
        %662 = vmatprep.subr.mxu0 0.0
        %663 = vmatpush1.msra.mxu0 0.0
        %664 = vmatprep.subr.mxu0 0.0
        %665 = vmatpush1.msra.mxu0 0.0
        %666 = vmatprep.subr.mxu0 0.0
        %667 = vmatpush1.msra.mxu0 0.0
        %668 = vmatprep.subr.mxu0 0.0
        %669 = vmatpush1.msra.mxu0 0.0
        %670 = vmatprep.subr.mxu0 0.0
        %671 = vmatpush1.msra.mxu0 0.0
        %672 = vmatprep.subr.mxu0 0.0
        %673 = vmatpush1.msra.mxu0 0.0
        %674 = vmatprep.subr.mxu0 0.0
        %675 = vmatpush1.msra.mxu0 0.0
        %676 = vmatprep.subr.mxu0 0.0
        %677 = vmatpush1.msra.mxu0 0.0
        %678 = vmatprep.subr.mxu0 0.0
        %679 = vmatpush1.msra.mxu0 0.0
        %680 = vmatprep.subr.mxu0 0.0
        %681 = vmatpush1.msra.mxu0 0.0
        %682 = vmatprep.subr.mxu0 0.0
        %683 = vmatpush1.msra.mxu0 0.0
        %684 = vmatprep.subr.mxu0 0.0
        %685 = vmatpush1.msra.mxu0 0.0
        %686 = vmatprep.subr.mxu0 0.0
        %687 = vmatpush1.msra.mxu0 0.0
        %688 = vmatprep.subr.mxu0 0.0
        %689 = vmatpush1.msra.mxu0 0.0
        %690 = vmatprep.subr.mxu0 0.0
        %691 = vmatpush1.msra.mxu0 0.0
        %692 = vmatprep.subr.mxu0 0.0
        %693 = vmatpush1.msra.mxu0 0.0
        %694 = vmatprep.subr.mxu0 0.0
        %695 = vmatpush1.msra.mxu0 0.0
        %696 = vmatprep.subr.mxu0 0.0
        %697 = vmatpush1.msra.mxu0 0.0
        %698 = vmatprep.subr.mxu0 0.0
        %699 = vmatpush1.msra.mxu0 0.0
        %700 = vmatprep.subr.mxu0 0.0
        %701 = vmatpush1.msra.mxu0 0.0
        %702 = vmatprep.subr.mxu0 0.0
        %703 = vmatpush1.msra.mxu0 0.0
        %704 = vmatprep.subr.mxu0 0.0
        %705 = vmatpush1.msra.mxu0 0.0
        %706 = vmatprep.mubr.f32.mxu0 0.0
        %707 = vmatmul.mubr.f32.gmra.mrb[0].mxu0 %v640
        %v708 = vpop.f32.mrb[0].mxu0
        %v709 = vadd.f32 %v636, %v708
        %v710 = vpop.f32.mrb[0].mxu0
        %711 = vdwg.mxu0
        %v712 = vsub.f32 0.0, %v709
        %v713 = vmul.f32 %v712, 1.442695
        %v714 = vpow.pop %v713
        %v715 = vadd.f32 %v714, 1.0
        %v716 = vrcp.pop %v715
        %v717 = vmul.f32 1.0, %v716
        %v718 = vlaneseq
        %v719 = vshrl.u32 %v718, 7
        %v720 = vsub.s32 0, %v719
        %v721 = vrot.slane %v717, %v720
        %723 = vbcast.lane.b32.xlu0 %v721, 256
        %v724 = vpop.permute.xlu0 %723
        %s726 = sor.u32 256, 8
        %727 = vbcast.lane.b32.xlu0 %v721, %s726
        %v728 = vpop.permute.xlu0 %727
        %s730 = sor.u32 256, 16
        %731 = vbcast.lane.b32.xlu0 %v721, %s730
        %v732 = vpop.permute.xlu0 %731
        %s734 = sor.u32 256, 24
        %735 = vbcast.lane.b32.xlu0 %v721, %s734
        %v736 = vpop.permute.xlu0 %735
        %v737 = vlaneseq
        %v738 = vshrl.u32 %v737, 7
        %v739 = vsub.s32 1, %v738
        %v740 = vrot.slane %v717, %v739
        %742 = vbcast.lane.b32.xlu0 %v740, 256
        %v743 = vpop.permute.xlu0 %742
        %s745 = sor.u32 256, 8
        %746 = vbcast.lane.b32.xlu0 %v740, %s745
        %v747 = vpop.permute.xlu0 %746
        %s749 = sor.u32 256, 16
        %750 = vbcast.lane.b32.xlu0 %v740, %s749
        %v751 = vpop.permute.xlu0 %750
        %s753 = sor.u32 256, 24
        %754 = vbcast.lane.b32.xlu0 %v740, %s753
        %v755 = vpop.permute.xlu0 %754
        %v756 = vmul.f32 %v234, %v724
        %v757 = vmul.f32 %v235, %v724
        %v758 = vmul.f32 %v236, %v728
        %v759 = vmul.f32 %v237, %v728
        %v760 = vmul.f32 %v238, %v732
        %v761 = vmul.f32 %v239, %v732
        %v762 = vmul.f32 %v240, %v736
        %v763 = vmul.f32 %v241, %v736
        %v764 = vmul.f32 %v242, %v743
        %v765 = vmul.f32 %v243, %v743
        %v766 = vmul.f32 %v244, %v747
        %v767 = vmul.f32 %v245, %v747
        %v768 = vmul.f32 %v246, %v751
        %v769 = vmul.f32 %v247, %v751
        %v770 = vmul.f32 %v248, %v755
        %v771 = vmul.f32 %v249, %v755
        %v772 = vadd.f32 %v756, %v758
        %v773 = vadd.f32 %v772, %v760
        %v774 = vadd.f32 %v773, %v762
        %v775 = vrot.slane %v774, 4
        %v776 = vadd.f32 %v774, %v775
        %v777 = vrot.slane %v776, 2
        %v778 = vadd.f32 %v776, %v777
        %v779 = vrot.slane %v778, 1
        %v780 = vadd.f32 %v778, %v779
        %v781 = vadd.f32 %v757, %v759
        %v782 = vadd.f32 %v781, %v761
        %v783 = vadd.f32 %v782, %v763
        %v784 = vrot.slane %v783, 4
        %v785 = vadd.f32 %v783, %v784
        %v786 = vrot.slane %v785, 2
        %v787 = vadd.f32 %v785, %v786
        %v788 = vrot.slane %v787, 1
        %v789 = vadd.f32 %v787, %v788
        %v790 = vadd.f32 %v764, %v766
        %v791 = vadd.f32 %v790, %v768
        %v792 = vadd.f32 %v791, %v770
        %v793 = vrot.slane %v792, 4
        %v794 = vadd.f32 %v792, %v793
        %v795 = vrot.slane %v794, 2
        %v796 = vadd.f32 %v794, %v795
        %v797 = vrot.slane %v796, 1
        %v798 = vadd.f32 %v796, %v797
        %v799 = vadd.f32 %v765, %v767
        %v800 = vadd.f32 %v799, %v769
        %v801 = vadd.f32 %v800, %v771
        %v802 = vrot.slane %v801, 4
        %v803 = vadd.f32 %v801, %v802
        %v804 = vrot.slane %v803, 2
        %v805 = vadd.f32 %v803, %v804
        %v806 = vrot.slane %v805, 1
        %v807 = vadd.f32 %v805, %v806
        %v808 = vmul.f32 %v780, 0.03125
        %v809 = vmul.f32 %v789, 0.03125
        %v810 = vmul.f32 %v798, 0.03125
        %v811 = vmul.f32 %v807, 0.03125
        %v812 = vmax.f32 %v756, %v758
        %v813 = vmax.f32 %v812, %v760
        %v814 = vmax.f32 %v813, %v762
        %v815 = vrot.slane %v814, 4
        %v816 = vmax.f32 %v814, %v815
        %v817 = vrot.slane %v816, 2
        %v818 = vmax.f32 %v816, %v817
        %v819 = vrot.slane %v818, 1
        %v820 = vmax.f32 %v818, %v819
        %v821 = vmax.f32 %v757, %v759
        %v822 = vmax.f32 %v821, %v761
        %v823 = vmax.f32 %v822, %v763
        %v824 = vrot.slane %v823, 4
        %v825 = vmax.f32 %v823, %v824
        %v826 = vrot.slane %v825, 2
        %v827 = vmax.f32 %v825, %v826
        %v828 = vrot.slane %v827, 1
        %v829 = vmax.f32 %v827, %v828
        %v830 = vmax.f32 %v764, %v766
        %v831 = vmax.f32 %v830, %v768
        %v832 = vmax.f32 %v831, %v770
        %v833 = vrot.slane %v832, 4
        %v834 = vmax.f32 %v832, %v833
        %v835 = vrot.slane %v834, 2
        %v836 = vmax.f32 %v834, %v835
        %v837 = vrot.slane %v836, 1
        %v838 = vmax.f32 %v836, %v837
        %v839 = vmax.f32 %v765, %v767
        %v840 = vmax.f32 %v839, %v769
        %v841 = vmax.f32 %v840, %v771
        %v842 = vrot.slane %v841, 4
        %v843 = vmax.f32 %v841, %v842
        %v844 = vrot.slane %v843, 2
        %v845 = vmax.f32 %v843, %v844
        %v846 = vrot.slane %v845, 1
        %v847 = vmax.f32 %v845, %v846
        %v852 = vsel %vm365, %v810, %v808
        %v853 = vsel %vm365, %v811, %v809
        %v860 = vsel %vm365, %v838, %v820
        %v861 = vsel %vm365, %v847, %v829
        %v864 = vld [vmem:[#allocation5] sm:$0xff]
        %v865 = vld [vmem:[#allocation5 + $0x8] sm:$0xff]
        %v866 = vld [vmem:[#allocation5 + $0x10] sm:$0xff]
        %v867 = vld [vmem:[#allocation5 + $0x18] sm:$0xff]
        %v868 = vld [vmem:[#allocation5 + $0x20] sm:$0xff]
        %v869 = vld [vmem:[#allocation5 + $0x28] sm:$0xff]
        %v870 = vld [vmem:[#allocation5 + $0x30] sm:$0xff]
        %v871 = vld [vmem:[#allocation5 + $0x38] sm:$0xff]
        %v872 = vld [vmem:[#allocation5 + $0x40] sm:$0xff]
        %v873 = vld [vmem:[#allocation5 + $0x48] sm:$0xff]
        %v874 = vld [vmem:[#allocation5 + $0x50] sm:$0xff]
        %v875 = vld [vmem:[#allocation5 + $0x58] sm:$0xff]
        %v876 = vld [vmem:[#allocation5 + $0x60] sm:$0xff]
        %v877 = vld [vmem:[#allocation5 + $0x68] sm:$0xff]
        %v878 = vld [vmem:[#allocation5 + $0x70] sm:$0xff]
        %v879 = vld [vmem:[#allocation5 + $0x78] sm:$0xff]
        %v880 = vld [vmem:[#allocation5 + $0x80] sm:$0xff]
        %v881 = vld [vmem:[#allocation5 + $0x88] sm:$0xff]
        %v882 = vld [vmem:[#allocation5 + $0x90] sm:$0xff]
        %v883 = vld [vmem:[#allocation5 + $0x98] sm:$0xff]
        %v884 = vld [vmem:[#allocation5 + $0xa0] sm:$0xff]
        %v885 = vld [vmem:[#allocation5 + $0xa8] sm:$0xff]
        %v886 = vld [vmem:[#allocation5 + $0xb0] sm:$0xff]
        %v887 = vld [vmem:[#allocation5 + $0xb8] sm:$0xff]
        %v888 = vld [vmem:[#allocation5 + $0xc0] sm:$0xff]
        %v889 = vld [vmem:[#allocation5 + $0xc8] sm:$0xff]
        %v890 = vld [vmem:[#allocation5 + $0xd0] sm:$0xff]
        %v891 = vld [vmem:[#allocation5 + $0xd8] sm:$0xff]
        %v892 = vld [vmem:[#allocation5 + $0xe0] sm:$0xff]
        %v893 = vld [vmem:[#allocation5 + $0xe8] sm:$0xff]
        %v894 = vld [vmem:[#allocation5 + $0xf0] sm:$0xff]
        %v895 = vld [vmem:[#allocation5 + $0xf8] sm:$0xff]
        %v896 = vld [vmem:[#allocation5 + $0x100] sm:$0xff]
        %v897 = vld [vmem:[#allocation5 + $0x108] sm:$0xff]
        %v898 = vld [vmem:[#allocation5 + $0x110] sm:$0xff]
        %v899 = vld [vmem:[#allocation5 + $0x118] sm:$0xff]
        %v900 = vld [vmem:[#allocation5 + $0x120] sm:$0xff]
        %v901 = vld [vmem:[#allocation5 + $0x128] sm:$0xff]
        %v902 = vld [vmem:[#allocation5 + $0x130] sm:$0xff]
        %v903 = vld [vmem:[#allocation5 + $0x138] sm:$0xff]
        %v904 = vld [vmem:[#allocation5 + $0x140] sm:$0xff]
        %v905 = vld [vmem:[#allocation5 + $0x148] sm:$0xff]
        %v906 = vld [vmem:[#allocation5 + $0x150] sm:$0xff]
        %v907 = vld [vmem:[#allocation5 + $0x158] sm:$0xff]
        %v908 = vld [vmem:[#allocation5 + $0x160] sm:$0xff]
        %v909 = vld [vmem:[#allocation5 + $0x168] sm:$0xff]
        %v910 = vld [vmem:[#allocation5 + $0x170] sm:$0xff]
        %v911 = vld [vmem:[#allocation5 + $0x178] sm:$0xff]
        %v912 = vld [vmem:[#allocation5 + $0x180] sm:$0xff]
        %v913 = vld [vmem:[#allocation5 + $0x188] sm:$0xff]
        %v914 = vld [vmem:[#allocation5 + $0x190] sm:$0xff]
        %v915 = vld [vmem:[#allocation5 + $0x198] sm:$0xff]
        %v916 = vld [vmem:[#allocation5 + $0x1a0] sm:$0xff]
        %v917 = vld [vmem:[#allocation5 + $0x1a8] sm:$0xff]
        %v918 = vld [vmem:[#allocation5 + $0x1b0] sm:$0xff]
        %v919 = vld [vmem:[#allocation5 + $0x1b8] sm:$0xff]
        %v920 = vld [vmem:[#allocation5 + $0x1c0] sm:$0xff]
        %v921 = vld [vmem:[#allocation5 + $0x1c8] sm:$0xff]
        %v922 = vld [vmem:[#allocation5 + $0x1d0] sm:$0xff]
        %v923 = vld [vmem:[#allocation5 + $0x1d8] sm:$0xff]
        %v924 = vld [vmem:[#allocation5 + $0x1e0] sm:$0xff]
        %v925 = vld [vmem:[#allocation5 + $0x1e8] sm:$0xff]
        %v926 = vld [vmem:[#allocation5 + $0x1f0] sm:$0xff]
        %v927 = vld [vmem:[#allocation5 + $0x1f8] sm:$0xff]
        %v928 = vld [vmem:[#allocation5 + $0x200] sm:$0xff]
        %v929 = vld [vmem:[#allocation5 + $0x208] sm:$0xff]
        %v930 = vld [vmem:[#allocation5 + $0x210] sm:$0xff]
        %v931 = vld [vmem:[#allocation5 + $0x218] sm:$0xff]
        %v932 = vld [vmem:[#allocation5 + $0x220] sm:$0xff]
        %v933 = vld [vmem:[#allocation5 + $0x228] sm:$0xff]
        %v934 = vld [vmem:[#allocation5 + $0x230] sm:$0xff]
        %v935 = vld [vmem:[#allocation5 + $0x238] sm:$0xff]
        %v936 = vld [vmem:[#allocation5 + $0x240] sm:$0xff]
        %v937 = vld [vmem:[#allocation5 + $0x248] sm:$0xff]
        %v938 = vld [vmem:[#allocation5 + $0x250] sm:$0xff]
        %v939 = vld [vmem:[#allocation5 + $0x258] sm:$0xff]
        %v940 = vld [vmem:[#allocation5 + $0x260] sm:$0xff]
        %v941 = vld [vmem:[#allocation5 + $0x268] sm:$0xff]
        %v942 = vld [vmem:[#allocation5 + $0x270] sm:$0xff]
        %v943 = vld [vmem:[#allocation5 + $0x278] sm:$0xff]
        %v944 = vld [vmem:[#allocation5 + $0x280] sm:$0xff]
        %v945 = vld [vmem:[#allocation5 + $0x288] sm:$0xff]
        %v946 = vld [vmem:[#allocation5 + $0x290] sm:$0xff]
        %v947 = vld [vmem:[#allocation5 + $0x298] sm:$0xff]
        %v948 = vld [vmem:[#allocation5 + $0x2a0] sm:$0xff]
        %v949 = vld [vmem:[#allocation5 + $0x2a8] sm:$0xff]
        %v950 = vld [vmem:[#allocation5 + $0x2b0] sm:$0xff]
        %v951 = vld [vmem:[#allocation5 + $0x2b8] sm:$0xff]
        %v952 = vld [vmem:[#allocation5 + $0x2c0] sm:$0xff]
        %v953 = vld [vmem:[#allocation5 + $0x2c8] sm:$0xff]
        %v954 = vld [vmem:[#allocation5 + $0x2d0] sm:$0xff]
        %v955 = vld [vmem:[#allocation5 + $0x2d8] sm:$0xff]
        %v956 = vld [vmem:[#allocation5 + $0x2e0] sm:$0xff]
        %v957 = vld [vmem:[#allocation5 + $0x2e8] sm:$0xff]
        %v958 = vld [vmem:[#allocation5 + $0x2f0] sm:$0xff]
        %v959 = vld [vmem:[#allocation5 + $0x2f8] sm:$0xff]
        %v960 = vld [vmem:[#allocation5 + $0x300] sm:$0xff]
        %v961 = vld [vmem:[#allocation5 + $0x308] sm:$0xff]
        %v962 = vld [vmem:[#allocation5 + $0x310] sm:$0xff]
        %v963 = vld [vmem:[#allocation5 + $0x318] sm:$0xff]
        %v964 = vld [vmem:[#allocation5 + $0x320] sm:$0xff]
        %v965 = vld [vmem:[#allocation5 + $0x328] sm:$0xff]
        %v966 = vld [vmem:[#allocation5 + $0x330] sm:$0xff]
        %v967 = vld [vmem:[#allocation5 + $0x338] sm:$0xff]
        %v968 = vld [vmem:[#allocation5 + $0x340] sm:$0xff]
        %v969 = vld [vmem:[#allocation5 + $0x348] sm:$0xff]
        %v970 = vld [vmem:[#allocation5 + $0x350] sm:$0xff]
        %v971 = vld [vmem:[#allocation5 + $0x358] sm:$0xff]
        %v972 = vld [vmem:[#allocation5 + $0x360] sm:$0xff]
        %v973 = vld [vmem:[#allocation5 + $0x368] sm:$0xff]
        %v974 = vld [vmem:[#allocation5 + $0x370] sm:$0xff]
        %v975 = vld [vmem:[#allocation5 + $0x378] sm:$0xff]
        %v976 = vld [vmem:[#allocation5 + $0x380] sm:$0xff]
        %v977 = vld [vmem:[#allocation5 + $0x388] sm:$0xff]
        %v978 = vld [vmem:[#allocation5 + $0x390] sm:$0xff]
        %v979 = vld [vmem:[#allocation5 + $0x398] sm:$0xff]
        %v980 = vld [vmem:[#allocation5 + $0x3a0] sm:$0xff]
        %v981 = vld [vmem:[#allocation5 + $0x3a8] sm:$0xff]
        %v982 = vld [vmem:[#allocation5 + $0x3b0] sm:$0xff]
        %v983 = vld [vmem:[#allocation5 + $0x3b8] sm:$0xff]
        %v984 = vld [vmem:[#allocation5 + $0x3c0] sm:$0xff]
        %v985 = vld [vmem:[#allocation5 + $0x3c8] sm:$0xff]
        %v986 = vld [vmem:[#allocation5 + $0x3d0] sm:$0xff]
        %v987 = vld [vmem:[#allocation5 + $0x3d8] sm:$0xff]
        %v988 = vld [vmem:[#allocation5 + $0x3e0] sm:$0xff]
        %v989 = vld [vmem:[#allocation5 + $0x3e8] sm:$0xff]
        %v990 = vld [vmem:[#allocation5 + $0x3f0] sm:$0xff]
        %v991 = vld [vmem:[#allocation5 + $0x3f8] sm:$0xff]
        %992 = vmatprep.subr.mxu0 %v865
        %993 = vmatpush1.msra.mxu0 %v864
        %994 = vmatprep.subr.mxu0 %v867
        %995 = vmatpush1.msra.mxu0 %v866
        %996 = vmatprep.subr.mxu0 %v869
        %997 = vmatpush1.msra.mxu0 %v868
        %998 = vmatprep.subr.mxu0 %v871
        %999 = vmatpush1.msra.mxu0 %v870
        %1000 = vmatprep.subr.mxu0 %v873
        %1001 = vmatpush1.msra.mxu0 %v872
        %1002 = vmatprep.subr.mxu0 %v875
        %1003 = vmatpush1.msra.mxu0 %v874
        %1004 = vmatprep.subr.mxu0 %v877
        %1005 = vmatpush1.msra.mxu0 %v876
        %1006 = vmatprep.subr.mxu0 %v879
        %1007 = vmatpush1.msra.mxu0 %v878
        %1008 = vmatprep.subr.mxu0 %v881
        %1009 = vmatpush1.msra.mxu0 %v880
        %1010 = vmatprep.subr.mxu0 %v883
        %1011 = vmatpush1.msra.mxu0 %v882
        %1012 = vmatprep.subr.mxu0 %v885
        %1013 = vmatpush1.msra.mxu0 %v884
        %1014 = vmatprep.subr.mxu0 %v887
        %1015 = vmatpush1.msra.mxu0 %v886
        %1016 = vmatprep.subr.mxu0 %v889
        %1017 = vmatpush1.msra.mxu0 %v888
        %1018 = vmatprep.subr.mxu0 %v891
        %1019 = vmatpush1.msra.mxu0 %v890
        %1020 = vmatprep.subr.mxu0 %v893
        %1021 = vmatpush1.msra.mxu0 %v892
        %1022 = vmatprep.subr.mxu0 %v895
        %1023 = vmatpush1.msra.mxu0 %v894
        %1024 = vmatprep.subr.mxu0 %v897
        %1025 = vmatpush1.msra.mxu0 %v896
        %1026 = vmatprep.subr.mxu0 %v899
        %1027 = vmatpush1.msra.mxu0 %v898
        %1028 = vmatprep.subr.mxu0 %v901
        %1029 = vmatpush1.msra.mxu0 %v900
        %1030 = vmatprep.subr.mxu0 %v903
        %1031 = vmatpush1.msra.mxu0 %v902
        %1032 = vmatprep.subr.mxu0 %v905
        %1033 = vmatpush1.msra.mxu0 %v904
        %1034 = vmatprep.subr.mxu0 %v907
        %1035 = vmatpush1.msra.mxu0 %v906
        %1036 = vmatprep.subr.mxu0 %v909
        %1037 = vmatpush1.msra.mxu0 %v908
        %1038 = vmatprep.subr.mxu0 %v911
        %1039 = vmatpush1.msra.mxu0 %v910
        %1040 = vmatprep.subr.mxu0 %v913
        %1041 = vmatpush1.msra.mxu0 %v912
        %1042 = vmatprep.subr.mxu0 %v915
        %1043 = vmatpush1.msra.mxu0 %v914
        %1044 = vmatprep.subr.mxu0 %v917
        %1045 = vmatpush1.msra.mxu0 %v916
        %1046 = vmatprep.subr.mxu0 %v919
        %1047 = vmatpush1.msra.mxu0 %v918
        %1048 = vmatprep.subr.mxu0 %v921
        %1049 = vmatpush1.msra.mxu0 %v920
        %1050 = vmatprep.subr.mxu0 %v923
        %1051 = vmatpush1.msra.mxu0 %v922
        %1052 = vmatprep.subr.mxu0 %v925
        %1053 = vmatpush1.msra.mxu0 %v924
        %1054 = vmatprep.subr.mxu0 %v927
        %1055 = vmatpush1.msra.mxu0 %v926
        %1056 = vmatprep.mubr.f32.mxu0 %v853
        %1057 = vmatmul.mubr.f32.gmra.mrb[0].mxu0 %v852
        %v1058 = vpop.f32.mrb[0].mxu0
        %v1059 = vadd.f32 0.0, %v1058
        %v1060 = vpop.f32.mrb[0].mxu0
        %v1061 = vadd.f32 0.0, %v1060
        %1062 = vdwg.mxu0
        %1063 = vmatprep.subr.mxu0 %v929
        %1064 = vmatpush1.msra.mxu0 %v928
        %1065 = vmatprep.subr.mxu0 %v931
        %1066 = vmatpush1.msra.mxu0 %v930
        %1067 = vmatprep.subr.mxu0 %v933
        %1068 = vmatpush1.msra.mxu0 %v932
        %1069 = vmatprep.subr.mxu0 %v935
        %1070 = vmatpush1.msra.mxu0 %v934
        %1071 = vmatprep.subr.mxu0 %v937
        %1072 = vmatpush1.msra.mxu0 %v936
        %1073 = vmatprep.subr.mxu0 %v939
        %1074 = vmatpush1.msra.mxu0 %v938
        %1075 = vmatprep.subr.mxu0 %v941
        %1076 = vmatpush1.msra.mxu0 %v940
        %1077 = vmatprep.subr.mxu0 %v943
        %1078 = vmatpush1.msra.mxu0 %v942
        %1079 = vmatprep.subr.mxu0 %v945
        %1080 = vmatpush1.msra.mxu0 %v944
        %1081 = vmatprep.subr.mxu0 %v947
        %1082 = vmatpush1.msra.mxu0 %v946
        %1083 = vmatprep.subr.mxu0 %v949
        %1084 = vmatpush1.msra.mxu0 %v948
        %1085 = vmatprep.subr.mxu0 %v951
        %1086 = vmatpush1.msra.mxu0 %v950
        %1087 = vmatprep.subr.mxu0 %v953
        %1088 = vmatpush1.msra.mxu0 %v952
        %1089 = vmatprep.subr.mxu0 %v955
        %1090 = vmatpush1.msra.mxu0 %v954
        %1091 = vmatprep.subr.mxu0 %v957
        %1092 = vmatpush1.msra.mxu0 %v956
        %1093 = vmatprep.subr.mxu0 %v959
        %1094 = vmatpush1.msra.mxu0 %v958
        %1095 = vmatprep.subr.mxu0 %v961
        %1096 = vmatpush1.msra.mxu0 %v960
        %1097 = vmatprep.subr.mxu0 %v963
        %1098 = vmatpush1.msra.mxu0 %v962
        %1099 = vmatprep.subr.mxu0 %v965
        %1100 = vmatpush1.msra.mxu0 %v964
        %1101 = vmatprep.subr.mxu0 %v967
        %1102 = vmatpush1.msra.mxu0 %v966
        %1103 = vmatprep.subr.mxu0 %v969
        %1104 = vmatpush1.msra.mxu0 %v968
        %1105 = vmatprep.subr.mxu0 %v971
        %1106 = vmatpush1.msra.mxu0 %v970
        %1107 = vmatprep.subr.mxu0 %v973
        %1108 = vmatpush1.msra.mxu0 %v972
        %1109 = vmatprep.subr.mxu0 %v975
        %1110 = vmatpush1.msra.mxu0 %v974
        %1111 = vmatprep.subr.mxu0 %v977
        %1112 = vmatpush1.msra.mxu0 %v976
        %1113 = vmatprep.subr.mxu0 %v979
        %1114 = vmatpush1.msra.mxu0 %v978
        %1115 = vmatprep.subr.mxu0 %v981
        %1116 = vmatpush1.msra.mxu0 %v980
        %1117 = vmatprep.subr.mxu0 %v983
        %1118 = vmatpush1.msra.mxu0 %v982
        %1119 = vmatprep.subr.mxu0 %v985
        %1120 = vmatpush1.msra.mxu0 %v984
        %1121 = vmatprep.subr.mxu0 %v987
        %1122 = vmatpush1.msra.mxu0 %v986
        %1123 = vmatprep.subr.mxu0 %v989
        %1124 = vmatpush1.msra.mxu0 %v988
        %1125 = vmatprep.subr.mxu0 %v991
        %1126 = vmatpush1.msra.mxu0 %v990
        %1127 = vmatprep.mubr.f32.mxu0 %v861
        %1128 = vmatmul.mubr.f32.gmra.mrb[0].mxu0 %v860
        %v1129 = vpop.f32.mrb[0].mxu0
        %v1130 = vadd.f32 %v1059, %v1129
        %v1131 = vpop.f32.mrb[0].mxu0
        %v1132 = vadd.f32 %v1061, %v1131
        %1133 = vdwg.mxu0
        %v1134 = vsub.f32 0.0, %v1130
        %v1135 = vsub.f32 0.0, %v1132
        %v1136 = vmul.f32 %v1134, 1.442695
        %v1137 = vpow.pop %v1136
        %v1138 = vmul.f32 %v1135, 1.442695
        %v1139 = vpow.pop %v1138
        %v1140 = vadd.f32 %v1137, 1.0
        %v1141 = vadd.f32 %v1139, 1.0
        %v1142 = vrcp.pop %v1140
        %v1143 = vmul.f32 1.0, %v1142
        %v1144 = vrcp.pop %v1141
        %v1145 = vmul.f32 1.0, %v1144
        %v1148 = vcombine.low %v1143, %v1145
        %v1150 = vunpack.c.l.s4 1966171168
        %v1151 = vunpack.c.0.s8 %v1150
        %v1152 = vlaneseq
        %v1153 = vshrl.u32 %v1152, 7
        %v1154 = vsub.s32 %v1151, %v1153
        %v1155 = vrot.slane %v1148, %v1154
        %v1156 = vcombine.high %v1155, %v1155
        %v1158 = vunpack.c.l.s4 1966171168
        %v1159 = vunpack.c.0.s8 %v1158
        %v1160 = vlaneseq
        %v1161 = vshrl.u32 %v1160, 7
        %v1162 = vsub.s32 %v1159, %v1161
        %v1163 = vrot.slane %v1155, %v1162
        %v1165 = vunpack.c.l.s4 1966171168
        %v1166 = vunpack.c.0.s8 %v1165
        %v1167 = vlaneseq
        %v1168 = vshrl.u32 %v1167, 7
        %v1169 = vsub.s32 %v1166, %v1168
        %v1170 = vrot.slane %v1156, %v1169
        %v1171 = vlaneseq
        %v1172 = vshrl.u32 %v1171, 7
        %v1173 = vsub.s32 0, %v1172
        %v1174 = vrot.slane %v1163, %v1173
        %v1175 = vlaneseq
        %v1176 = vshrl.u32 %v1175, 7
        %v1177 = vsub.s32 1, %v1176
        %v1178 = vrot.slane %v1163, %v1177
        %v1179 = vlaneseq
        %v1180 = vshrl.u32 %v1179, 7
        %v1181 = vsub.s32 0, %v1180
        %v1182 = vrot.slane %v1170, %v1181
        %v1183 = vlaneseq
        %v1184 = vshrl.u32 %v1183, 7
        %v1185 = vsub.s32 1, %v1184
        %v1186 = vrot.slane %v1170, %v1185
        %v1191 = vmul.f32 %v756, %v1174
        %v1192 = vmul.f32 %v757, %v1178
        %v1193 = vmul.f32 %v758, %v1174
        %v1194 = vmul.f32 %v759, %v1178
        %v1195 = vmul.f32 %v760, %v1174
        %v1196 = vmul.f32 %v761, %v1178
        %v1197 = vmul.f32 %v762, %v1174
        %v1198 = vmul.f32 %v763, %v1178
        %v1199 = vmul.f32 %v764, %v1182
        %v1200 = vmul.f32 %v765, %v1186
        %v1201 = vmul.f32 %v766, %v1182
        %v1202 = vmul.f32 %v767, %v1186
        %v1203 = vmul.f32 %v768, %v1182
        %v1204 = vmul.f32 %v769, %v1186
        %v1205 = vmul.f32 %v770, %v1182
        %v1206 = vmul.f32 %v771, %v1186
        %1207 = vst [vmem:[%s231] sm:$0xff] %v1191
        %1208 = vst [vmem:[%s231 + $0x8] sm:$0xff] %v1192
        %1209 = vst [vmem:[%s231 + $0x10] sm:$0xff] %v1193
        %1210 = vst [vmem:[%s231 + $0x18] sm:$0xff] %v1194
        %1211 = vst [vmem:[%s231 + $0x20] sm:$0xff] %v1195
        %1212 = vst [vmem:[%s231 + $0x28] sm:$0xff] %v1196
        %1213 = vst [vmem:[%s231 + $0x30] sm:$0xff] %v1197
        %1214 = vst [vmem:[%s231 + $0x38] sm:$0xff] %v1198
        %1215 = vst [vmem:[%s231 + $0x40] sm:$0xff] %v1199
        %1216 = vst [vmem:[%s231 + $0x48] sm:$0xff] %v1200
        %1217 = vst [vmem:[%s231 + $0x50] sm:$0xff] %v1201
        %1218 = vst [vmem:[%s231 + $0x58] sm:$0xff] %v1202
        %1219 = vst [vmem:[%s231 + $0x60] sm:$0xff] %v1203
        %1220 = vst [vmem:[%s231 + $0x68] sm:$0xff] %v1204
        %1221 = vst [vmem:[%s231 + $0x70] sm:$0xff] %v1205
        %1222 = vst [vmem:[%s231 + $0x78] sm:$0xff] %v1206
        %s1223 = sand.u32 %s119, 1
        %s1224 = scalar_lea.sflag [#allocation4], %s1223
        %s1225 = sand.u32 %s119, 1
        %s1226 = smul.addr %s1225, 128
        %s1227 = scalar_lea.vmem [#allocation7], %s1226
        // Predicated region
        $region45: #{tpu_custom_call.1} parent=35 // pred_check
          %p1228 = pneg %p129
        $region46: #{tpu_custom_call.1} parent=35 // pred_check_branch
          %1230 = sbr.rel (%p1228) target = $region48
        $region47: #{tpu_custom_call.1} parent=35 // pred_region
          %s1231 = smul.u32 2, %s22
          %s1233 = ssub.s32 2048, 2048
          %1234 = vsyncadd %s1224, %s1233
          %s1235 = smul.addr %s1231, 8
          %s1236 = smul.addr %s1235, 128
          %s1237 = scalar_lea.hbm %s4, %s1236
          %s1238 = sshll.u32 %s1227, 4
          %s1239 = int_to_ptr.vmem [resolvable:$true] %s1238
          %1244 = dma.vmem_to_hbm [thread:$0]  %s1239, 2048, %s1237, %s1224, 256, 256, 16
        $region48: #{tpu_custom_call.1} parent=35 // pred_fallthru
          _
      $region36: #{tpu_custom_call.1} parent=5 // pred_fallthru
        _
      %p1245 = scmp.le.s32.totalorder 2, %s17
      // Predicated region
      $region49: #{tpu_custom_call.1} parent=5 // pred_check
        %p1246 = pneg %p1245
      $region50: #{tpu_custom_call.1} parent=5 // pred_check_branch
        %1248 = sbr.rel (%p1246) target = $region52
      $region51: #{tpu_custom_call.1} parent=5 // pred_region
        %s1249 = ssub.s32 %s17, 2
        // Predicated region
        $region53: #{tpu_custom_call.1} parent=51 // pred_check
          %p1250 = pneg %p135
        $region54: #{tpu_custom_call.1} parent=51 // pred_check_branch
          %1252 = sbr.rel (%p1250) target = $region56
        $region55: #{tpu_custom_call.1} parent=51 // pred_region
          %s1253 = sand.u32 %s120, 1
          %s1254 = scalar_lea.sflag [#allocation4], %s1253
          %s1255 = sand.u32 %s120, 1
          %s1256 = smul.addr %s1255, 128
          %s1257 = scalar_lea.vmem [#allocation7], %s1256
          %1258 = dma.done %s1254, 2048
        $region56: #{tpu_custom_call.1} parent=51 // pred_fallthru
          _
      $region52: #{tpu_custom_call.1} parent=5 // pred_fallthru
        _
    $region6: #{tpu_custom_call.1} parent=1 // loop_footer
      %s21 = sadd.s32 1, %s17
    $region7: #{tpu_custom_call.1} parent=1 // loop_footer_branch
      %16 = sbr.rel target = $region3
    $region8: #{tpu_custom_call.1} parent=1 // loop_exit
      _
    %1259 = vsyncpa [#allocation3], 1
    %s1260 = scalar_lea.sflag [#allocation3], 1
    %1261 = vsyncpa %s1260, 1
    %1262 = vsyncpa [#allocation6], 1
    %1263 = vsyncpa [#allocation4], 1
    %s1264 = scalar_lea.sflag [#allocation4], 1
    %1265 = vsyncpa %s1264, 1

</llo_original>
